<compile_context>
chip_gen: v7x
topology: tpu7x:2x2x1
jax: 0.10.0
libtpu: 0.0.40
codegen_flags: <defaults>
</compile_context>

<pallas_src>
import jax
import jax.numpy as jnp
from jax.experimental import pallas as pl
from jax.experimental.pallas import tpu as pltpu


def _mlp_kernel(x_ref, wgu_ref, wd_ref, o_ref, acc_ref):
    # x_ref:   (tm, H)      token-row tile (compute dtype, e.g. bf16)
    # wgu_ref: (H, 2*ti)    fused [gate_j | up_j] weight chunk for this I-slice
    # wd_ref:  (ti, H)      down_proj weight chunk
    # o_ref:   (tm, H)      output tile (resident across the I axis)
    # acc_ref: (tm, H) f32  VMEM accumulator
    j = pl.program_id(1)

    @pl.when(j == 0)
    def _():
        acc_ref[...] = jnp.zeros_like(acc_ref)

    x = x_ref[...]
    # One fused MXU pass covers both gate_ and up_ projections of this I-chunk.
    gu = jnp.dot(x, wgu_ref[...], preferred_element_type=jnp.float32)
    ti = gu.shape[-1] // 2
    g = gu[:, :ti]
    u = gu[:, ti:]
    # silu(g) = g * sigmoid(g); exp + approx reciprocal run on the EUP slot.
    silu_g = g * pl.reciprocal(1.0 + jnp.exp(-g), approx=True)
    h = (silu_g * u).astype(wd_ref.dtype)
    acc_ref[...] += jnp.dot(h, wd_ref[...], preferred_element_type=jnp.float32)

    @pl.when(j == pl.num_programs(1) - 1)
    def _():
        o_ref[...] = acc_ref[...].astype(o_ref.dtype)


def _pick_tile(total, preferred):
    """Largest divisor of `total` that is <= preferred (or total if small)."""
    if total <= preferred:
        return total
    if total % preferred == 0:
        return preferred
    for t in range(preferred, 0, -1):
        if total % t == 0:
            return t
    return total


def mlp_forward(x, w_gate, w_up, w_down, *, tm=256, ti=512,
                compute_dtype=jnp.bfloat16):
    """x: [B, S, H]; weights stored as (in, out) = torch Linear.weight.T."""
    B, S, H = x.shape
    I = w_gate.shape[1]
    T = B * S

    tm = _pick_tile(T, tm)
    ti = _pick_tile(I, ti)
    n_i = I // ti

    out_dtype = x.dtype
    xc = x.reshape(T, H).astype(compute_dtype)
    wg = w_gate.astype(compute_dtype)
    wu = w_up.astype(compute_dtype)
    wd = w_down.astype(compute_dtype)

    # Fuse gate/up so each I-chunk j is one contiguous (H, 2*ti) slab:
    # columns [j*2ti, j*2ti+ti) = gate chunk j, [j*2ti+ti, (j+1)*2ti) = up chunk j.
    wgu = jnp.concatenate(
        [wg.reshape(H, n_i, 1, ti), wu.reshape(H, n_i, 1, ti)], axis=2
    ).reshape(H, 2 * I)

    itemsize = jnp.dtype(compute_dtype).itemsize
    out_itemsize = jnp.dtype(out_dtype).itemsize
    # Double-buffered tiles + f32 accumulator + headroom for intermediates.
    vmem_est = (2 * tm * H * itemsize            # x tile
                + 2 * H * 2 * ti * itemsize      # fused gate/up chunk
                + 2 * ti * H * itemsize          # down chunk
                + 2 * tm * H * out_itemsize      # output tile
                + tm * H * 4                     # accumulator scratch
                + 3 * tm * 2 * ti * 4)           # f32 intermediates
    vmem_limit = int(min(max(int(vmem_est * 1.4), 32 * 1024 * 1024),
                         64 * 1024 * 1024))      # stay inside v7x's 64 MiB

    cost = pl.CostEstimate(
        flops=6 * T * H * I + 4 * T * I,
        transcendentals=T * I,
        bytes_accessed=(T * H * itemsize + 2 * H * I * itemsize
                        + I * H * itemsize + T * H * out_itemsize))

    out2d = pl.pallas_call(
        _mlp_kernel,
        out_shape=jax.ShapeDtypeStruct((T, H), out_dtype),
        grid_spec=pltpu.PrefetchScalarGridSpec(
            num_scalar_prefetch=0,
            grid=(T // tm, n_i),
            in_specs=[
                pl.BlockSpec((tm, H), lambda i, j: (i, 0)),       # token rows
                pl.BlockSpec((H, 2 * ti), lambda i, j: (0, j)),   # fused gate/up
                pl.BlockSpec((ti, H), lambda i, j: (j, 0)),       # down chunk
            ],
            out_specs=pl.BlockSpec((tm, H), lambda i, j: (i, 0)),
            scratch_shapes=[pltpu.VMEM((tm, H), jnp.float32)],
        ),
        compiler_params=pltpu.CompilerParams(
            dimension_semantics=("parallel", "arbitrary"),
            vmem_limit_bytes=vmem_limit),
        cost_estimate=cost,
    )(xc, wgu, wd)

    return out2d.reshape(B, S, H)


def mlp_reference(x, w_gate, w_up, w_down, compute_dtype=jnp.bfloat16):
    # Reference with the same bf16 input/weight rounding, math in f32.
    xc = x.astype(compute_dtype).astype(jnp.float32)
    wg = w_gate.astype(compute_dtype).astype(jnp.float32)
    wu = w_up.astype(compute_dtype).astype(jnp.float32)
    wd = w_down.astype(compute_dtype).astype(jnp.float32)
    g = xc @ wg
    u = xc @ wu
    return ((jax.nn.silu(g) * u) @ wd).astype(x.dtype)


if __name__ == "__main__":
    # Small, LLaMA-like shapes
    B, S, H, I = 2, 8, 32, 64
    key = jax.random.PRNGKey(0)
    kx, kg, ku, kd = jax.random.split(key, 4)

    x = jax.random.normal(kx, (B, S, H), dtype=jnp.float32)
    # Deterministic synthetic weights (stored as (in, out) = Linear.weight.T)
    w_gate = jax.random.normal(kg, (H, I), dtype=jnp.float32) * 0.05
    w_up = jax.random.normal(ku, (H, I), dtype=jnp.float32) * 0.05
    w_down = jax.random.normal(kd, (I, H), dtype=jnp.float32) * 0.05
    # TODO(synk): LoRA adapter paths of Linear.forward (load_adapter /
    # ModelData routing) are runtime-configured and not part of the base
    # forward; only the base projection path is implemented.

    out = mlp_forward(x, w_gate, w_up, w_down)
    jax.block_until_ready(out)

    ref = mlp_reference(x, w_gate, w_up, w_down)
    assert out.shape == (B, S, H)
    max_err = float(jnp.max(jnp.abs(out - ref)))
    assert jnp.allclose(out, ref, atol=3e-2, rtol=3e-2), f"max err {max_err}"
    print("KERNEL_OK")
</pallas_src>

<mosaic_0001>
module attributes {stable_mosaic.version = 11 : i64} {
  func.func @_mlp_kernel(%arg0: i32, %arg1: i32, %arg2: memref<16x32xbf16, #tpu.memory_space<vmem>>, %arg3: memref<32x128xbf16, #tpu.memory_space<vmem>>, %arg4: memref<64x32xbf16, #tpu.memory_space<vmem>>, %arg5: memref<16x32xf32, #tpu.memory_space<vmem>>, %arg6: memref<16x32xf32, #tpu.memory_space<vmem>>) attributes {dimension_semantics = [#tpu.dimension_semantics<parallel>, #tpu.dimension_semantics<arbitrary>], iteration_bounds = array<i64: 1, 1>, scalar_prefetch = 0 : i64, scratch_operands = 1 : i64, tpu.core_type = #tpu.core_type<tc>, window_params = [{transform_indices = @transform_0, window_bounds = array<i64: 16, 32>}, {transform_indices = @transform_1, window_bounds = array<i64: 32, 128>}, {transform_indices = @transform_2, window_bounds = array<i64: 64, 32>}, {transform_indices = @transform_3, window_bounds = array<i64: 16, 32>}]} {
    %c0_i32 = arith.constant 0 : i32
    %0 = arith.cmpi eq, %arg1, %c0_i32 : i32
    %1 = arith.extui %0 : i1 to i32
    %c0_i32_0 = arith.constant 0 : i32
    %2 = arith.cmpi ne, %1, %c0_i32_0 : i32
    scf.if %2 {
      %cst_15 = arith.constant 0.000000e+00 : f32
      %25 = vector.broadcast %cst_15 : f32 to vector<16x32xf32>
      %c0_16 = arith.constant 0 : index
      %c0_17 = arith.constant 0 : index
      %26 = vector.load %arg6[%c0_16, %c0_17] : memref<16x32xf32, #tpu.memory_space<vmem>>, vector<16x32xf32>
      tpu.vector_store %arg6[%c0_16, %c0_17], %25 {strides = array<i32>} : memref<16x32xf32, #tpu.memory_space<vmem>>, vector<16x32xf32>,
    } else {
    }
    %c0 = arith.constant 0 : index
    %c0_1 = arith.constant 0 : index
    %3 = vector.load %arg2[%c0, %c0_1] : memref<16x32xbf16, #tpu.memory_space<vmem>>, vector<16x32xbf16>
    %c0_2 = arith.constant 0 : index
    %c0_3 = arith.constant 0 : index
    %4 = vector.load %arg3[%c0_2, %c0_3] : memref<32x128xbf16, #tpu.memory_space<vmem>>, vector<32x128xbf16>
    %cst = arith.constant dense<0.000000e+00> : vector<16x128xf32>
    %5 = tpu.matmul %3, %4, %cst {dimension_numbers = #tpu.dot_dimension_numbers<[1], [0], [0], [1], [0, 0, 1, 1], [], []>} : vector<16x32xbf16>, vector<32x128xbf16>, vector<16x128xf32> -> vector<16x128xf32>
    %6 = vector.extract_strided_slice %5 {offsets = [0, 0], sizes = [16, 64], strides = [1, 1]} : vector<16x128xf32> to vector<16x64xf32>
    %7 = vector.extract_strided_slice %5 {offsets = [0, 64], sizes = [16, 64], strides = [1, 1]} : vector<16x128xf32> to vector<16x64xf32>
    %cst_4 = arith.constant 0.000000e+00 : f32
    %8 = vector.broadcast %cst_4 : f32 to vector<16x64xf32>
    %9 = arith.subf %8, %6 : vector<16x64xf32>
    %10 = math.exp %9 : vector<16x64xf32>
    %cst_5 = arith.constant 1.000000e+00 : f32
    %11 = vector.broadcast %cst_5 : f32 to vector<16x64xf32>
    %12 = arith.addf %11, %10 : vector<16x64xf32>
    %13 = tpu.reciprocal %12 {approx = true} : vector<16x64xf32> -> vector<16x64xf32>
    %14 = arith.mulf %6, %13 : vector<16x64xf32>
    %15 = arith.mulf %14, %7 : vector<16x64xf32>
    %16 = arith.truncf %15 : vector<16x64xf32> to vector<16x64xbf16>
    %c0_6 = arith.constant 0 : index
    %c0_7 = arith.constant 0 : index
    %17 = vector.load %arg6[%c0_6, %c0_7] : memref<16x32xf32, #tpu.memory_space<vmem>>, vector<16x32xf32>
    %c0_8 = arith.constant 0 : index
    %c0_9 = arith.constant 0 : index
    %18 = vector.load %arg4[%c0_8, %c0_9] : memref<64x32xbf16, #tpu.memory_space<vmem>>, vector<64x32xbf16>
    %cst_10 = arith.constant dense<0.000000e+00> : vector<16x32xf32>
    %19 = tpu.matmul %16, %18, %cst_10 {dimension_numbers = #tpu.dot_dimension_numbers<[1], [0], [0], [1], [0, 0, 1, 1], [], []>} : vector<16x64xbf16>, vector<64x32xbf16>, vector<16x32xf32> -> vector<16x32xf32>
    %20 = arith.addf %17, %19 : vector<16x32xf32>
    %c0_11 = arith.constant 0 : index
    %c0_12 = arith.constant 0 : index
    %21 = vector.load %arg6[%c0_11, %c0_12] : memref<16x32xf32, #tpu.memory_space<vmem>>, vector<16x32xf32>
    tpu.vector_store %arg6[%c0_11, %c0_12], %20 {strides = array<i32>} : memref<16x32xf32, #tpu.memory_space<vmem>>, vector<16x32xf32>,
    %c0_i32_13 = arith.constant 0 : i32
    %22 = arith.cmpi eq, %arg1, %c0_i32_13 : i32
    %23 = arith.extui %22 : i1 to i32
    %c0_i32_14 = arith.constant 0 : i32
    %24 = arith.cmpi ne, %23, %c0_i32_14 : i32
    scf.if %24 {
      %c0_15 = arith.constant 0 : index
      %c0_16 = arith.constant 0 : index
      %25 = vector.load %arg6[%c0_15, %c0_16] : memref<16x32xf32, #tpu.memory_space<vmem>>, vector<16x32xf32>
      %c0_17 = arith.constant 0 : index
      %c0_18 = arith.constant 0 : index
      %26 = vector.load %arg5[%c0_17, %c0_18] : memref<16x32xf32, #tpu.memory_space<vmem>>, vector<16x32xf32>
      tpu.vector_store %arg5[%c0_17, %c0_18], %25 {strides = array<i32>} : memref<16x32xf32, #tpu.memory_space<vmem>>, vector<16x32xf32>,
    } else {
    }
    return
  }
  func.func @transform_0(%arg0: i32, %arg1: i32) -> (i32, i32) {
    %c0_i32 = arith.constant 0 : i32
    %c0_i32_0 = arith.constant 0 : i32
    return %arg0, %c0_i32 : i32, i32
  }
  func.func @transform_1(%arg0: i32, %arg1: i32) -> (i32, i32) {
    %c0_i32 = arith.constant 0 : i32
    %c0_i32_0 = arith.constant 0 : i32
    return %c0_i32, %arg1 : i32, i32
  }
  func.func @transform_2(%arg0: i32, %arg1: i32) -> (i32, i32) {
    %c0_i32 = arith.constant 0 : i32
    %c0_i32_0 = arith.constant 0 : i32
    return %arg1, %c0_i32 : i32, i32
  }
  func.func @transform_3(%arg0: i32, %arg1: i32) -> (i32, i32) {
    %c0_i32 = arith.constant 0 : i32
    %c0_i32_0 = arith.constant 0 : i32
    return %arg0, %c0_i32 : i32, i32
  }
}

</mosaic_0001>

<llo_original>
// kernel: tpu_custom_call.1
$region0: #{tpu_custom_call.1}
  #allocation0 [shape = 'u32[]', space=smem, size = 0x4, offset = 0x4, fixed_abs, tag = 'smem constant byte address 0x4 - core index']
  #allocation1 [shape = 'u32[144,128]{1,0:T(1,128)}', space=vmem, size = 0x12000, scoped, tag = 'internal scratch']
  #allocation2 [shape = 'f32[16,32]{1,0:T(8,128)}', space=vmem, size = 0x2000, scoped, tag = 'scratch operand']
  %s0 = inlined_call_operand.vmem [shape: bf16[16,32], index: 0, kind: input, shape index: {}]
  %s1 = inlined_call_operand.vmem [shape: bf16[32,128], index: 1, kind: input, shape index: {}]
  %s2 = inlined_call_operand.vmem [shape: bf16[64,32], index: 2, kind: input, shape index: {}]
  %s3 = inlined_call_operand.hbm [shape: f32[16,32], index: 3, kind: output, shape index: {}]
  %s4 = sld [smem:[#allocation0]]
  $region30: #{tpu_custom_call.1} parent=0
    _
  %s6 = ssub.s32 1, %s4
  %s7 = scalar_select 0, %s6, %s4
  $region1: #{tpu_custom_call.1} parent=0
    #allocation3 [shape = 'u8[8192]{0}', space=vmem, size = 0x2000, scoped, tag = 'output window, operand 0, single buffered']
    #allocation4 [shape = 's32[1]{0}', space=sflag, size = 0x4, scoped, tag = 'scoped memory for tpu_custom_call.1']
    %8 = vsyncpa [#allocation4], 0
    // Predicated region
    $region2: #{tpu_custom_call.1} parent=1 // pred_check
      _
    $region3: #{tpu_custom_call.1} parent=1 // pred_check_branch
      %10 = sbr.rel (0) target = $region5
    $region4: #{tpu_custom_call.1} parent=1 // pred_region
      _
    $region5: #{tpu_custom_call.1} parent=1 // pred_fallthru
      _
    // Predicated region
    $region6: #{tpu_custom_call.1} parent=1 // pred_check
      _
    $region7: #{tpu_custom_call.1} parent=1 // pred_check_branch
      %12 = sbr.rel (0) target = $region9
    $region8: #{tpu_custom_call.1} parent=1 // pred_region
      _
    $region9: #{tpu_custom_call.1} parent=1 // pred_fallthru
      _
    // Predicated region
    $region10: #{tpu_custom_call.1} parent=1 // pred_check
      _
    $region11: #{tpu_custom_call.1} parent=1 // pred_check_branch
      %14 = sbr.rel (0) target = $region13
    $region12: #{tpu_custom_call.1} parent=1 // pred_region
      _
    $region13: #{tpu_custom_call.1} parent=1 // pred_fallthru
      _
    %p16 = scmp.eq.s32.totalorder 0, 0
    // Predicated region
    $region14: #{tpu_custom_call.1} parent=1 // pred_check
      %p17 = pneg %p16
    $region15: #{tpu_custom_call.1} parent=1 // pred_check_branch
      %19 = sbr.rel (%p17) target = $region17
    $region16: #{tpu_custom_call.1} parent=1 // pred_region
      %vm20 = vcmask 261120
      %21 = vst.msk [vmem:[#allocation2] sm:$0xff] %vm20, 0.0
      %22 = vst.msk [vmem:[#allocation2 + $0x8] sm:$0xff] %vm20, 0.0
    $region17: #{tpu_custom_call.1} parent=1 // pred_fallthru
      _
    %v23 = vld [vmem:[%s0] sm:$0xf]
    %v24 = vld [vmem:[%s0 + $0x4] sm:$0xf]
    %v25 = vld [vmem:[%s1] sm:$0xf]
    %v26 = vld [vmem:[%s1 + $0x4] sm:$0xf]
    %v27 = vld [vmem:[%s1 + $0x8] sm:$0xf]
    %v28 = vld [vmem:[%s1 + $0xc] sm:$0xf]
    %v31 = vunpack.c.l.b16 %v23
    %v32 = vunpack.c.l.b16 %v24
    %v33 = vpack.c.b16 %v32, %v31
    %v38 = vunpack.c.l.b16 %v25
    %v39 = vunpack.c.l.b16 %v26
    %v40 = vunpack.c.l.b16 %v27
    %v41 = vunpack.c.l.b16 %v28
    %v42 = vpack.c.b16 %v39, %v38
    %v43 = vpack.c.b16 %v41, %v40
    %vm46 = vcmask 261120
    %v48 = vsel %vm46, %v33, 0
    %50 = vmatprep.subr.bf16.mxu0 0
    %51 = vmatpush1.bf16.msra.mxu0 %v42
    %52 = vmatprep.subr.bf16.mxu0 0
    %53 = vmatpush1.bf16.msra.mxu0 %v43
    %54 = vmatprep.subr.bf16.mxu0 0
    %55 = vmatpush1.bf16.msra.mxu0 0
    %56 = vmatprep.subr.bf16.mxu0 0
    %57 = vmatpush1.bf16.msra.mxu0 0
    %58 = vmatprep.subr.bf16.mxu0 0
    %59 = vmatpush1.bf16.msra.mxu0 0
    %60 = vmatprep.subr.bf16.mxu0 0
    %61 = vmatpush1.bf16.msra.mxu0 0
    %62 = vmatprep.subr.bf16.mxu0 0
    %63 = vmatpush1.bf16.msra.mxu0 0
    %64 = vmatprep.subr.bf16.mxu0 0
    %65 = vmatpush1.bf16.msra.mxu0 0
    %66 = vmatprep.subr.bf16.mxu0 0
    %67 = vmatpush1.bf16.msra.mxu0 0
    %68 = vmatprep.subr.bf16.mxu0 0
    %69 = vmatpush1.bf16.msra.mxu0 0
    %70 = vmatprep.subr.bf16.mxu0 0
    %71 = vmatpush1.bf16.msra.mxu0 0
    %72 = vmatprep.subr.bf16.mxu0 0
    %73 = vmatpush1.bf16.msra.mxu0 0
    %74 = vmatprep.subr.bf16.mxu0 0
    %75 = vmatpush1.bf16.msra.mxu0 0
    %76 = vmatprep.subr.bf16.mxu0 0
    %77 = vmatpush1.bf16.msra.mxu0 0
    %78 = vmatprep.subr.bf16.mxu0 0
    %79 = vmatpush1.bf16.msra.mxu0 0
    %80 = vmatprep.subr.bf16.mxu0 0
    %81 = vmatpush1.bf16.msra.mxu0 0
    %82 = vmatprep.mubr.bf16.mxu0 0
    %83 = vmatmul.mubr.bf16.gmra.mrb[0].mxu0 %v48
    %v84 = vpop.f32.mrb[0].mxu0
    %v85 = vadd.f32 0.0, %v84
    %v86 = vpop.f32.mrb[0].mxu0
    %v87 = vpop.f32.mrb[0].mxu0
    %v88 = vadd.f32 0.0, %v87
    %v89 = vpop.f32.mrb[0].mxu0
    %90 = vdwg.mxu0
    %v91 = vsub.f32 0.0, %v85
    %v92 = vsub.f32 0.0, %v88
    %v93 = vmul.f32 %v91, 1.442695
    %v94 = vpow.pop %v93
    %v95 = vmul.f32 %v92, 1.442695
    %v96 = vpow.pop %v95
    %v97 = vadd.f32 %v94, 1.0
    %v98 = vadd.f32 %v96, 1.0
    %v99 = vrcp.pop %v97
    %v100 = vrcp.pop %v98
    %v101 = vmul.f32 %v85, %v99
    %v102 = vmul.f32 %v88, %v100
    %105 = vrot.lane.b32.xlu0 %v85, 64
    %v106 = vpop.permute.xlu0 %105
    %107 = vrot.lane.b32.xlu0 %v88, 64
    %v108 = vpop.permute.xlu0 %107
    %v111 = vmul.f32 %v101, %v106
    %v112 = vmul.f32 %v102, %v108
    %v113 = vpack.c.bf16 %v112, %v111
    %v114 = vld [vmem:[#allocation2] sm:$0xff]
    %v115 = vld [vmem:[#allocation2 + $0x8] sm:$0xff]
    %v116 = vld [vmem:[%s2] sm:$0xf]
    %v117 = vld [vmem:[%s2 + $0x4] sm:$0xf]
    %v118 = vld [vmem:[%s2 + $0x8] sm:$0xf]
    %v119 = vld [vmem:[%s2 + $0xc] sm:$0xf]
    %v120 = vld [vmem:[%s2 + $0x10] sm:$0xf]
    %v121 = vld [vmem:[%s2 + $0x14] sm:$0xf]
    %v122 = vld [vmem:[%s2 + $0x18] sm:$0xf]
    %v123 = vld [vmem:[%s2 + $0x1c] sm:$0xf]
    %v132 = vunpack.c.l.b16 %v116
    %v133 = vunpack.c.l.b16 %v117
    %v134 = vunpack.c.l.b16 %v118
    %v135 = vunpack.c.l.b16 %v119
    %v136 = vunpack.c.l.b16 %v120
    %v137 = vunpack.c.l.b16 %v121
    %v138 = vunpack.c.l.b16 %v122
    %v139 = vunpack.c.l.b16 %v123
    %v140 = vpack.c.b16 %v133, %v132
    %v141 = vpack.c.b16 %v135, %v134
    %v142 = vpack.c.b16 %v137, %v136
    %v143 = vpack.c.b16 %v139, %v138
    %vm148 = vcmask 523264
    %v150 = vsel %vm148, %v113, 0
    %152 = vmatprep.subr.bf16.mxu0 0
    %153 = vmatpush1.bf16.msra.mxu0 %v140
    %154 = vmatprep.subr.bf16.mxu0 0
    %155 = vmatpush1.bf16.msra.mxu0 %v141
    %156 = vmatprep.subr.bf16.mxu0 0
    %157 = vmatpush1.bf16.msra.mxu0 %v142
    %158 = vmatprep.subr.bf16.mxu0 0
    %159 = vmatpush1.bf16.msra.mxu0 %v143
    %160 = vmatprep.subr.bf16.mxu0 0
    %161 = vmatpush1.bf16.msra.mxu0 0
    %162 = vmatprep.subr.bf16.mxu0 0
    %163 = vmatpush1.bf16.msra.mxu0 0
    %164 = vmatprep.subr.bf16.mxu0 0
    %165 = vmatpush1.bf16.msra.mxu0 0
    %166 = vmatprep.subr.bf16.mxu0 0
    %167 = vmatpush1.bf16.msra.mxu0 0
    %168 = vmatprep.subr.bf16.mxu0 0
    %169 = vmatpush1.bf16.msra.mxu0 0
    %170 = vmatprep.subr.bf16.mxu0 0
    %171 = vmatpush1.bf16.msra.mxu0 0
    %172 = vmatprep.subr.bf16.mxu0 0
    %173 = vmatpush1.bf16.msra.mxu0 0
    %174 = vmatprep.subr.bf16.mxu0 0
    %175 = vmatpush1.bf16.msra.mxu0 0
    %176 = vmatprep.subr.bf16.mxu0 0
    %177 = vmatpush1.bf16.msra.mxu0 0
    %178 = vmatprep.subr.bf16.mxu0 0
    %179 = vmatpush1.bf16.msra.mxu0 0
    %180 = vmatprep.subr.bf16.mxu0 0
    %181 = vmatpush1.bf16.msra.mxu0 0
    %182 = vmatprep.subr.bf16.mxu0 0
    %183 = vmatpush1.bf16.msra.mxu0 0
    %184 = vmatprep.mubr.bf16.mxu0 0
    %185 = vmatmul.mubr.bf16.gmra.mrb[0].mxu0 %v150
    %v186 = vpop.f32.mrb[0].mxu0
    %v187 = vadd.f32 0.0, %v186
    %v188 = vpop.f32.mrb[0].mxu0
    %v189 = vpop.f32.mrb[0].mxu0
    %v190 = vadd.f32 0.0, %v189
    %v191 = vpop.f32.mrb[0].mxu0
    %192 = vdwg.mxu0
    %v193 = vadd.f32 %v114, %v187
    %v194 = vadd.f32 %v115, %v190
    %195 = vst.msk [vmem:[#allocation2] sm:$0xff] %vm46, %v193
    %196 = vst.msk [vmem:[#allocation2 + $0x8] sm:$0xff] %vm46, %v194
    // Predicated region
    $region18: #{tpu_custom_call.1} parent=1 // pred_check
      %p197 = pneg %p16
    $region19: #{tpu_custom_call.1} parent=1 // pred_check_branch
      %199 = sbr.rel (%p197) target = $region21
    $region20: #{tpu_custom_call.1} parent=1 // pred_region
      %v200 = vld [vmem:[#allocation2] sm:$0xff]
      %v201 = vld [vmem:[#allocation2 + $0x8] sm:$0xff]
      %202 = vst.msk [vmem:[#allocation3] sm:$0xff] %vm46, %v200
      %203 = vst.msk [vmem:[#allocation3 + $0x8] sm:$0xff] %vm46, %v201
    $region21: #{tpu_custom_call.1} parent=1 // pred_fallthru
      _
    // Predicated region
    $region22: #{tpu_custom_call.1} parent=1 // pred_check
      _
    $region23: #{tpu_custom_call.1} parent=1 // pred_check_branch
      %205 = sbr.rel (0) target = $region25
    $region24: #{tpu_custom_call.1} parent=1 // pred_region
      %s207 = ssub.s32 256, 256
      %208 = vsyncadd [#allocation4], %s207
      %s209 = sshll.u32 [#allocation3], 4
      %s210 = int_to_ptr.vmem [resolvable:$true] %s209
      %215 = dma.vmem_to_hbm [thread:$0]  %s210, 256, %s3, [#allocation4], 128, 128, 8
    $region25: #{tpu_custom_call.1} parent=1 // pred_fallthru
      _
    // Predicated region
    $region26: #{tpu_custom_call.1} parent=1 // pred_check
      _
    $region27: #{tpu_custom_call.1} parent=1 // pred_check_branch
      %217 = sbr.rel (0) target = $region29
    $region28: #{tpu_custom_call.1} parent=1 // pred_region
      %218 = dma.done [#allocation4], 256
    $region29: #{tpu_custom_call.1} parent=1 // pred_fallthru
      _
    %219 = vsyncpa [#allocation4], 1

</llo_original>
